<compile_context>
chip_gen: v6e
topology: v6e:2x2x1
jax: 0.10.0
libtpu: 0.0.40
codegen_flags: <defaults>
</compile_context>

<pallas_src>
import jax
import jax.numpy as jnp
from jax.experimental import pallas as pl
from jax.experimental.pallas import tpu as pltpu


def _round_up(x: int, m: int) -> int:
    return ((x + m - 1) // m) * m


def _vmem_limit_bytes() -> int:
    """Generation-aware scoped-VMEM limit: ~3/4 of physical, capped at 96 MiB."""
    try:
        cap = pltpu.get_tpu_info().vmem_capacity_bytes
    except Exception:
        cap = 64 * 1024 * 1024          # conservative default: v7x per-TC VMEM
    return min(cap * 3 // 4, 96 * 1024 * 1024)


# ---------------------------------------------------------------------------
# Kernels
# ---------------------------------------------------------------------------
def _mlp_kernel_resident(x_ref, w1_ref, b1_ref, w2_ref, b2_ref, o_ref):
    """Whole w1/w2 VMEM-resident: fc1 -> relu -> fc2 for one batch tile."""
    # fc1: bf16 operands on the MXU, f32 accumulation; x is cast in-kernel.
    h = jnp.dot(x_ref[...].astype(jnp.bfloat16), w1_ref[...],
                preferred_element_type=jnp.float32)
    h = jnp.maximum(h + b1_ref[...], 0.0)          # f32 epilogue (v5e has no bf16 VPU)
    y = jnp.dot(h.astype(jnp.bfloat16), w2_ref[...],
                preferred_element_type=jnp.float32)
    o_ref[...] = (y + b2_ref[...]).astype(o_ref.dtype)


def _mlp_kernel_hchunk(x_ref, w1_ref, b1_ref, w2_ref, b2_ref, o_ref, acc_ref):
    """H-chunked path: accumulate relu(x @ w1[:, hk] + b1[hk]) @ w2[hk, :]."""
    hk = pl.program_id(1)

    @pl.when(hk == 0)
    def _():
        acc_ref[...] = jnp.zeros_like(acc_ref)

    h = jnp.dot(x_ref[...].astype(jnp.bfloat16), w1_ref[...],
                preferred_element_type=jnp.float32)
    h = jnp.maximum(h + b1_ref[...], 0.0)
    acc_ref[...] += jnp.dot(h.astype(jnp.bfloat16), w2_ref[...],
                            preferred_element_type=jnp.float32)

    @pl.when(hk == pl.num_programs(1) - 1)
    def _():
        o_ref[...] = (acc_ref[...] + b2_ref[...]).astype(o_ref.dtype)


# ---------------------------------------------------------------------------
# Tiling / wrapper
# ---------------------------------------------------------------------------
def _choose_tiling(B, D, H, C, budget):
    """Pick (TB, TH, H_pad, C_pad) so the pipelined tiles fit in `budget` bytes."""
    # Lane-dense padded dims; v6e/v7x MXUs are 256 wide -> pad large H to 256.
    hq = 256 if H >= 256 else 128
    H_pad = _round_up(H, hq)
    C_pad = _round_up(C, 128)

    # Can the whole (bf16) weight set stay VMEM-resident (single-buffered)?
    w_resident = (D * H_pad + H_pad * C_pad) * 2 + (H_pad + C_pad) * 4
    if w_resident <= budget // 2:
        TH = H_pad
        w_bytes = w_resident
    else:
        # Chunk the hidden dim; chunks are double-buffered by the pipeline.
        per_h = 2 * ((D + C_pad) * 2 + 4)              # bytes per hidden unit
        TH = max(hq, min(H_pad, ((budget // 2) // per_h) // hq * hq))
        H_pad = _round_up(H, TH)
        w_bytes = 2 * (TH * (D + C_pad) * 2 + TH * 4) + C_pad * 4

    # Batch tile: x (2 bufs, f32) + out (2 bufs, f32) + acc scratch (chunked only)
    # + f32 hidden activations and their bf16 copy (~6 B/elem).
    acc_bytes = C_pad * 4 if TH < H_pad else 0
    per_row = 2 * D * 4 + 2 * C_pad * 4 + acc_bytes + TH * 6
    rem = max(budget - w_bytes, 8 * per_row)
    TB = max(8, min(rem // per_row, 1024) // 8 * 8)
    TB = min(TB, _round_up(B, 8))
    if B >= 128:
        # Keep >= 2 batch grid steps so the "parallel" axis can use both v7x cores.
        TB = min(TB, _round_up(pl.cdiv(B, 2), 8))
    return TB, TH, H_pad, C_pad


@jax.jit
def simple_nn_forward(x, w1, b1, w2, b2):
    """Fused fc1 -> relu -> fc2.

    x:  (B, D) float32
    w1: (D, H), b1: (H,)   (weights stored as (in, out), i.e. PyTorch weight.T)
    w2: (H, C), b2: (C,)
    returns: (B, C) float32
    """
    B, D = x.shape
    H = w1.shape[1]
    C = w2.shape[1]

    vmem_limit = _vmem_limit_bytes()
    budget = int(vmem_limit * 0.7)               # headroom for compiler scratch
    TB, TH, H_pad, C_pad = _choose_tiling(B, D, H, C, budget)
    n_hk = H_pad // TH
    grid_b = pl.cdiv(B, TB)

    # One-time (tiny) zero-pad of the parameters; matmul operands in bf16, biases
    # stay f32 for the epilogue.  x itself is NOT padded or cast in HBM.
    w1_p = jnp.zeros((D, H_pad), jnp.bfloat16).at[:, :H].set(w1.astype(jnp.bfloat16))
    b1_p = jnp.zeros((1, H_pad), jnp.float32).at[0, :H].set(b1.astype(jnp.float32))
    w2_p = jnp.zeros((H_pad, C_pad), jnp.bfloat16).at[:H, :C].set(w2.astype(jnp.bfloat16))
    b2_p = jnp.zeros((1, C_pad), jnp.float32).at[0, :C].set(b2.astype(jnp.float32))

    flops = 2 * grid_b * TB * (D * H_pad + H_pad * C_pad)
    bytes_accessed = (B * D * 4 + (D * H_pad + H_pad * C_pad) * 2
                      + (H_pad + C_pad) * 4 + B * C_pad * 4)

    resident = pl.Buffered(1)     # block index never changes -> single VMEM buffer

    if n_hk == 1:
        kernel = _mlp_kernel_resident
        grid = (grid_b,)
        in_specs = [
            pl.BlockSpec((TB, D), lambda i: (i, 0)),
            pl.BlockSpec((D, H_pad), lambda i: (0, 0), pipeline_mode=resident),
            pl.BlockSpec((1, H_pad), lambda i: (0, 0), pipeline_mode=resident),
            pl.BlockSpec((H_pad, C_pad), lambda i: (0, 0), pipeline_mode=resident),
            pl.BlockSpec((1, C_pad), lambda i: (0, 0), pipeline_mode=resident),
        ]
        out_specs = pl.BlockSpec((TB, C_pad), lambda i: (i, 0))
        scratch_shapes = []
        dim_sem = ("parallel",)
    else:
        # TODO(synk): extreme D (a single (TB,D)+(D,TH) pair exceeding VMEM) would
        # also need a D-chunk reduction axis; not needed for this module's sizes.
        kernel = _mlp_kernel_hchunk
        grid = (grid_b, n_hk)
        in_specs = [
            pl.BlockSpec((TB, D), lambda i, k: (i, 0)),
            pl.BlockSpec((D, TH), lambda i, k: (0, k)),
            pl.BlockSpec((1, TH), lambda i, k: (0, k)),
            pl.BlockSpec((TH, C_pad), lambda i, k: (k, 0)),
            pl.BlockSpec((1, C_pad), lambda i, k: (0, 0), pipeline_mode=resident),
        ]
        out_specs = pl.BlockSpec((TB, C_pad), lambda i, k: (i, 0))
        scratch_shapes = [pltpu.VMEM((TB, C_pad), jnp.float32)]
        dim_sem = ("parallel", "arbitrary")

    out = pl.pallas_call(
        kernel,
        out_shape=jax.ShapeDtypeStruct((B, C_pad), jnp.float32),
        grid=grid,
        in_specs=in_specs,
        out_specs=out_specs,
        scratch_shapes=scratch_shapes,
        compiler_params=pltpu.CompilerParams(
            dimension_semantics=dim_sem,
            vmem_limit_bytes=vmem_limit),
        cost_estimate=pl.CostEstimate(
            flops=flops, transcendentals=0, bytes_accessed=bytes_accessed),
    )(x, w1_p, b1_p, w2_p, b2_p)

    # Drop the zero lane-padding of num_classes (batch is not padded).
    return out[:, :C]


def init_params(key, input_size, num_classes, dtype=jnp.float32):
    """Deterministic init matching nn.Linear shapes (weights stored as (in, out))."""
    hidden = input_size // 2
    k1, k2, k3, k4 = jax.random.split(key, 4)
    bound1 = 1.0 / (input_size ** 0.5)
    bound2 = 1.0 / (hidden ** 0.5)
    w1 = jax.random.uniform(k1, (input_size, hidden), dtype, -bound1, bound1)
    b1 = jax.random.uniform(k2, (hidden,), dtype, -bound1, bound1)
    w2 = jax.random.uniform(k3, (hidden, num_classes), dtype, -bound2, bound2)
    b2 = jax.random.uniform(k4, (num_classes,), dtype, -bound2, bound2)
    return w1, b1, w2, b2


if __name__ == "__main__":
    input_size = 64      # D
    num_classes = 10     # C
    batch = 8            # B

    key = jax.random.PRNGKey(0)
    kx, kp = jax.random.split(key)
    x = jax.random.normal(kx, (batch, input_size), jnp.float32)
    w1, b1, w2, b2 = init_params(kp, input_size, num_classes)

    y = jax.block_until_ready(simple_nn_forward(x, w1, b1, w2, b2))
    assert y.shape == (batch, num_classes)

    # Reference with matching bf16-operand / f32-accumulate arithmetic.
    h_ref = jnp.dot(x.astype(jnp.bfloat16), w1.astype(jnp.bfloat16),
                    preferred_element_type=jnp.float32) + b1
    h_ref = jnp.maximum(h_ref, 0.0)
    ref_bf16 = jnp.dot(h_ref.astype(jnp.bfloat16), w2.astype(jnp.bfloat16),
                       preferred_element_type=jnp.float32) + b2
    assert jnp.allclose(y, ref_bf16, atol=1e-2, rtol=1e-2), "mismatch vs bf16 reference"

    # Looser check against the full-f32 math of the original module.
    ref_f32 = jnp.maximum(x @ w1 + b1, 0.0) @ w2 + b2
    assert jnp.allclose(y, ref_f32, atol=5e-2, rtol=5e-2), "mismatch vs f32 reference"

    print("KERNEL_OK")
</pallas_src>

<mosaic_0001>
module attributes {stable_mosaic.version = 11 : i64} {
  func.func @_mlp_kernel_resident(%arg0: i32, %arg1: memref<8x64xf32, #tpu.memory_space<vmem>>, %arg2: memref<64x128xbf16, #tpu.memory_space<vmem>>, %arg3: memref<1x128xf32, #tpu.memory_space<vmem>>, %arg4: memref<128x128xbf16, #tpu.memory_space<vmem>>, %arg5: memref<1x128xf32, #tpu.memory_space<vmem>>, %arg6: memref<8x128xf32, #tpu.memory_space<vmem>>) attributes {dimension_semantics = [#tpu.dimension_semantics<parallel>], iteration_bounds = array<i64: 1>, scalar_prefetch = 0 : i64, scratch_operands = 0 : i64, tpu.core_type = #tpu.core_type<tc>, window_params = [{transform_indices = @transform_0, window_bounds = array<i64: 8, 64>}, {pipeline_mode = #tpu.pipeline_mode<synchronous>, transform_indices = @transform_1, window_bounds = array<i64: 64, 128>}, {pipeline_mode = #tpu.pipeline_mode<synchronous>, transform_indices = @transform_2, window_bounds = array<i64: 1, 128>}, {pipeline_mode = #tpu.pipeline_mode<synchronous>, transform_indices = @transform_3, window_bounds = array<i64: 128, 128>}, {pipeline_mode = #tpu.pipeline_mode<synchronous>, transform_indices = @transform_4, window_bounds = array<i64: 1, 128>}, {transform_indices = @transform_5, window_bounds = array<i64: 8, 128>}]} {
    %c0 = arith.constant 0 : index
    %c0_0 = arith.constant 0 : index
    %0 = vector.load %arg1[%c0, %c0_0] : memref<8x64xf32, #tpu.memory_space<vmem>>, vector<8x64xf32>
    %1 = arith.truncf %0 : vector<8x64xf32> to vector<8x64xbf16>
    %c0_1 = arith.constant 0 : index
    %c0_2 = arith.constant 0 : index
    %2 = vector.load %arg2[%c0_1, %c0_2] : memref<64x128xbf16, #tpu.memory_space<vmem>>, vector<64x128xbf16>
    %cst = arith.constant dense<0.000000e+00> : vector<8x128xf32>
    %3 = tpu.matmul %1, %2, %cst {dimension_numbers = #tpu.dot_dimension_numbers<[1], [0], [0], [1], [0, 0, 1, 1], [], []>} : vector<8x64xbf16>, vector<64x128xbf16>, vector<8x128xf32> -> vector<8x128xf32>
    %c0_3 = arith.constant 0 : index
    %c0_4 = arith.constant 0 : index
    %4 = vector.load %arg3[%c0_3, %c0_4] : memref<1x128xf32, #tpu.memory_space<vmem>>, vector<1x128xf32>
    %5 = vector.broadcast %4 : vector<1x128xf32> to vector<8x128xf32>
    %6 = arith.addf %3, %5 : vector<8x128xf32>
    %cst_5 = arith.constant 0.000000e+00 : f32
    %7 = vector.broadcast %cst_5 : f32 to vector<8x128xf32>
    %8 = arith.maximumf %6, %7 : vector<8x128xf32>
    %9 = arith.truncf %8 : vector<8x128xf32> to vector<8x128xbf16>
    %c0_6 = arith.constant 0 : index
    %c0_7 = arith.constant 0 : index
    %10 = vector.load %arg4[%c0_6, %c0_7] : memref<128x128xbf16, #tpu.memory_space<vmem>>, vector<128x128xbf16>
    %cst_8 = arith.constant dense<0.000000e+00> : vector<8x128xf32>
    %11 = tpu.matmul %9, %10, %cst_8 {dimension_numbers = #tpu.dot_dimension_numbers<[1], [0], [0], [1], [0, 0, 1, 1], [], []>} : vector<8x128xbf16>, vector<128x128xbf16>, vector<8x128xf32> -> vector<8x128xf32>
    %c0_9 = arith.constant 0 : index
    %c0_10 = arith.constant 0 : index
    %12 = vector.load %arg5[%c0_9, %c0_10] : memref<1x128xf32, #tpu.memory_space<vmem>>, vector<1x128xf32>
    %13 = vector.broadcast %12 : vector<1x128xf32> to vector<8x128xf32>
    %14 = arith.addf %11, %13 : vector<8x128xf32>
    %c0_11 = arith.constant 0 : index
    %c0_12 = arith.constant 0 : index
    %15 = vector.load %arg6[%c0_11, %c0_12] : memref<8x128xf32, #tpu.memory_space<vmem>>, vector<8x128xf32>
    tpu.vector_store %arg6[%c0_11, %c0_12], %14 {strides = array<i32>} : memref<8x128xf32, #tpu.memory_space<vmem>>, vector<8x128xf32>,
    return
  }
  func.func @transform_0(%arg0: i32) -> (i32, i32) {
    %c0_i32 = arith.constant 0 : i32
    %c0_i32_0 = arith.constant 0 : i32
    return %arg0, %c0_i32 : i32, i32
  }
  func.func @transform_1(%arg0: i32) -> (i32, i32) {
    %c0_i32 = arith.constant 0 : i32
    %c0_i32_0 = arith.constant 0 : i32
    %c0_i32_1 = arith.constant 0 : i32
    return %c0_i32, %c0_i32_0 : i32, i32
  }
  func.func @transform_2(%arg0: i32) -> (i32, i32) {
    %c0_i32 = arith.constant 0 : i32
    %c0_i32_0 = arith.constant 0 : i32
    %c0_i32_1 = arith.constant 0 : i32
    return %c0_i32, %c0_i32_0 : i32, i32
  }
  func.func @transform_3(%arg0: i32) -> (i32, i32) {
    %c0_i32 = arith.constant 0 : i32
    %c0_i32_0 = arith.constant 0 : i32
    %c0_i32_1 = arith.constant 0 : i32
    return %c0_i32, %c0_i32_0 : i32, i32
  }
  func.func @transform_4(%arg0: i32) -> (i32, i32) {
    %c0_i32 = arith.constant 0 : i32
    %c0_i32_0 = arith.constant 0 : i32
    %c0_i32_1 = arith.constant 0 : i32
    return %c0_i32, %c0_i32_0 : i32, i32
  }
  func.func @transform_5(%arg0: i32) -> (i32, i32) {
    %c0_i32 = arith.constant 0 : i32
    %c0_i32_0 = arith.constant 0 : i32
    return %arg0, %c0_i32 : i32, i32
  }
}

</mosaic_0001>

<llo_original>
// kernel: simple_nn_forward.1
$region0: #{simple_nn_forward.1}
  #allocation0 [shape = 'u32[]', space=smem, size = 0x4, offset = 0x4, fixed_abs, tag = 'smem constant byte address 0x4 - core index']
  #allocation1 [shape = 'u32[144,128]{1,0:T(1,128)}', space=vmem, size = 0x12000, scoped, tag = 'internal scratch']
  %s0 = inlined_call_operand.vmem [shape: f32[8,64], index: 0, kind: input, shape index: {}]
  %s1 = inlined_call_operand.vmem [shape: bf16[64,128], index: 1, kind: input, shape index: {}]
  %s2 = inlined_call_operand.vmem [shape: f32[1,128], index: 2, kind: input, shape index: {}]
  %s3 = inlined_call_operand.vmem [shape: bf16[128,128], index: 3, kind: input, shape index: {}]
  %s4 = inlined_call_operand.vmem [shape: f32[1,128], index: 4, kind: input, shape index: {}]
  %s5 = inlined_call_operand.hbm [shape: f32[8,128], index: 5, kind: output, shape index: {}]
  %s6 = sld [smem:[#allocation0]]
  $region30: #{simple_nn_forward.1} parent=0
    _
  %s8 = ssub.s32 1, %s6
  %s9 = scalar_select 0, %s8, %s6
  $region1: #{simple_nn_forward.1} parent=0
    #allocation2 [shape = 'u8[4096]{0}', space=vmem, size = 0x1000, scoped, tag = 'output window, operand 0, single buffered']
    #allocation3 [shape = 's32[1]{0}', space=sflag, size = 0x4, scoped, tag = 'scoped memory for simple_nn_forward.1']
    %10 = vsyncpa [#allocation3], 0
    // Predicated region
    $region2: #{simple_nn_forward.1} parent=1 // pred_check
      _
    $region3: #{simple_nn_forward.1} parent=1 // pred_check_branch
      %12 = sbr.rel (0) target = $region5
    $region4: #{simple_nn_forward.1} parent=1 // pred_region
      _
    $region5: #{simple_nn_forward.1} parent=1 // pred_fallthru
      _
    // Predicated region
    $region6: #{simple_nn_forward.1} parent=1 // pred_check
      _
    $region7: #{simple_nn_forward.1} parent=1 // pred_check_branch
      %14 = sbr.rel (0) target = $region9
    $region8: #{simple_nn_forward.1} parent=1 // pred_region
      _
    $region9: #{simple_nn_forward.1} parent=1 // pred_fallthru
      _
    // Predicated region
    $region10: #{simple_nn_forward.1} parent=1 // pred_check
      _
    $region11: #{simple_nn_forward.1} parent=1 // pred_check_branch
      %16 = sbr.rel (0) target = $region13
    $region12: #{simple_nn_forward.1} parent=1 // pred_region
      _
    $region13: #{simple_nn_forward.1} parent=1 // pred_fallthru
      _
    // Predicated region
    $region14: #{simple_nn_forward.1} parent=1 // pred_check
      _
    $region15: #{simple_nn_forward.1} parent=1 // pred_check_branch
      %18 = sbr.rel (0) target = $region17
    $region16: #{simple_nn_forward.1} parent=1 // pred_region
      _
    $region17: #{simple_nn_forward.1} parent=1 // pred_fallthru
      _
    // Predicated region
    $region18: #{simple_nn_forward.1} parent=1 // pred_check
      _
    $region19: #{simple_nn_forward.1} parent=1 // pred_check_branch
      %20 = sbr.rel (0) target = $region21
    $region20: #{simple_nn_forward.1} parent=1 // pred_region
      _
    $region21: #{simple_nn_forward.1} parent=1 // pred_fallthru
      _
    %v22 = vld [vmem:[%s0] sm:$0xff]
    %v23 = vpack.c.bf16 %v22, %v22
    %v24 = vld [vmem:[%s1] sm:$0xf]
    %v25 = vld [vmem:[%s1 + $0x4] sm:$0xf]
    %v26 = vld [vmem:[%s1 + $0x8] sm:$0xf]
    %v27 = vld [vmem:[%s1 + $0xc] sm:$0xf]
    %v28 = vld [vmem:[%s1 + $0x10] sm:$0xf]
    %v29 = vld [vmem:[%s1 + $0x14] sm:$0xf]
    %v30 = vld [vmem:[%s1 + $0x18] sm:$0xf]
    %v31 = vld [vmem:[%s1 + $0x1c] sm:$0xf]
    %v32 = vld [vmem:[%s2] sm:$0x1]
    %v34 = vlaneseq
    %v35 = vshrl.u32 %v34, 7
    %v36 = vsub.s32 0, %v35
    %v37 = vrot.slane %v32, %v36
    %v47 = vunpack.c.l.b16 %v24
    %v48 = vunpack.c.l.b16 %v25
    %v49 = vunpack.c.l.b16 %v26
    %v50 = vunpack.c.l.b16 %v27
    %v51 = vunpack.c.l.b16 %v28
    %v52 = vunpack.c.l.b16 %v29
    %v53 = vunpack.c.l.b16 %v30
    %v54 = vunpack.c.l.b16 %v31
    %v55 = vpack.c.b16 %v48, %v47
    %v56 = vpack.c.b16 %v50, %v49
    %v57 = vpack.c.b16 %v52, %v51
    %v58 = vpack.c.b16 %v54, %v53
    %vm63 = vcmask 523264
    %v65 = vsel %vm63, %v23, 0
    %67 = vmatprep.subr.bf16.mxu0 0
    %68 = vmatpush1.bf16.msra.mxu0 0
    %69 = vmatprep.subr.bf16.mxu0 0
    %70 = vmatpush1.bf16.msra.mxu0 0
    %71 = vmatprep.subr.bf16.mxu0 0
    %72 = vmatpush1.bf16.msra.mxu0 0
    %73 = vmatprep.subr.bf16.mxu0 0
    %74 = vmatpush1.bf16.msra.mxu0 0
    %75 = vmatprep.subr.bf16.mxu0 0
    %76 = vmatpush1.bf16.msra.mxu0 %v58
    %77 = vmatprep.subr.bf16.mxu0 0
    %78 = vmatpush1.bf16.msra.mxu0 %v57
    %79 = vmatprep.subr.bf16.mxu0 0
    %80 = vmatpush1.bf16.msra.mxu0 %v56
    %81 = vmatprep.subr.bf16.mxu0 0
    %82 = vmatpush1.bf16.msra.mxu0 %v55
    %83 = vmatprep.subr.bf16.mxu0 0
    %84 = vmatpush2.bf16.msra.mxu0 0
    %85 = vmatprep.subr.bf16.mxu0 0
    %86 = vmatpush2.bf16.msra.mxu0 0
    %87 = vmatprep.subr.bf16.mxu0 0
    %88 = vmatpush2.bf16.msra.mxu0 0
    %89 = vmatprep.subr.bf16.mxu0 0
    %90 = vmatpush2.bf16.msra.mxu0 0
    %91 = vmatprep.subr.bf16.mxu0 0
    %92 = vmatpush2.bf16.msra.mxu0 0
    %93 = vmatprep.subr.bf16.mxu0 0
    %94 = vmatpush2.bf16.msra.mxu0 0
    %95 = vmatprep.subr.bf16.mxu0 0
    %96 = vmatpush2.bf16.msra.mxu0 0
    %97 = vmatprep.subr.bf16.mxu0 0
    %98 = vmatpush2.bf16.msra.mxu0 0
    %99 = vmatprep.mubr.bf16.mxu0 0
    %100 = vmatmul.mubr.bf16.gmra.mxu0 %v65
    %v101 = vpop.f32.mrf.mxu0
    %v102 = vadd.f32 %v37, %v101
    %v103 = vpop.f32.mrf.mxu0
    %v104 = vpop.f32.mrf.mxu0
    %v105 = vpop.f32.mrf.mxu0
    %106 = vdwg.mxu0
    %v107 = vmax.f32 %v102, 0.0
    %v108 = vpack.c.bf16 %v107, %v107
    %v109 = vld [vmem:[%s3] sm:$0xf]
    %v110 = vld [vmem:[%s3 + $0x4] sm:$0xf]
    %v111 = vld [vmem:[%s3 + $0x8] sm:$0xf]
    %v112 = vld [vmem:[%s3 + $0xc] sm:$0xf]
    %v113 = vld [vmem:[%s3 + $0x10] sm:$0xf]
    %v114 = vld [vmem:[%s3 + $0x14] sm:$0xf]
    %v115 = vld [vmem:[%s3 + $0x18] sm:$0xf]
    %v116 = vld [vmem:[%s3 + $0x1c] sm:$0xf]
    %v117 = vld [vmem:[%s3 + $0x20] sm:$0xf]
    %v118 = vld [vmem:[%s3 + $0x24] sm:$0xf]
    %v119 = vld [vmem:[%s3 + $0x28] sm:$0xf]
    %v120 = vld [vmem:[%s3 + $0x2c] sm:$0xf]
    %v121 = vld [vmem:[%s3 + $0x30] sm:$0xf]
    %v122 = vld [vmem:[%s3 + $0x34] sm:$0xf]
    %v123 = vld [vmem:[%s3 + $0x38] sm:$0xf]
    %v124 = vld [vmem:[%s3 + $0x3c] sm:$0xf]
    %v125 = vld [vmem:[%s4] sm:$0x1]
    %v127 = vlaneseq
    %v128 = vshrl.u32 %v127, 7
    %v129 = vsub.s32 0, %v128
    %v130 = vrot.slane %v125, %v129
    %v148 = vunpack.c.l.b16 %v109
    %v149 = vunpack.c.l.b16 %v110
    %v150 = vunpack.c.l.b16 %v111
    %v151 = vunpack.c.l.b16 %v112
    %v152 = vunpack.c.l.b16 %v113
    %v153 = vunpack.c.l.b16 %v114
    %v154 = vunpack.c.l.b16 %v115
    %v155 = vunpack.c.l.b16 %v116
    %v156 = vunpack.c.l.b16 %v117
    %v157 = vunpack.c.l.b16 %v118
    %v158 = vunpack.c.l.b16 %v119
    %v159 = vunpack.c.l.b16 %v120
    %v160 = vunpack.c.l.b16 %v121
    %v161 = vunpack.c.l.b16 %v122
    %v162 = vunpack.c.l.b16 %v123
    %v163 = vunpack.c.l.b16 %v124
    %v164 = vpack.c.b16 %v149, %v148
    %v165 = vpack.c.b16 %v151, %v150
    %v166 = vpack.c.b16 %v153, %v152
    %v167 = vpack.c.b16 %v155, %v154
    %v168 = vpack.c.b16 %v157, %v156
    %v169 = vpack.c.b16 %v159, %v158
    %v170 = vpack.c.b16 %v161, %v160
    %v171 = vpack.c.b16 %v163, %v162
    %180 = vmatprep.subr.bf16.mxu0 0
    %181 = vmatpush1.bf16.msra.mxu0 %v171
    %182 = vmatprep.subr.bf16.mxu0 0
    %183 = vmatpush1.bf16.msra.mxu0 %v170
    %184 = vmatprep.subr.bf16.mxu0 0
    %185 = vmatpush1.bf16.msra.mxu0 %v169
    %186 = vmatprep.subr.bf16.mxu0 0
    %187 = vmatpush1.bf16.msra.mxu0 %v168
    %188 = vmatprep.subr.bf16.mxu0 0
    %189 = vmatpush1.bf16.msra.mxu0 %v167
    %190 = vmatprep.subr.bf16.mxu0 0
    %191 = vmatpush1.bf16.msra.mxu0 %v166
    %192 = vmatprep.subr.bf16.mxu0 0
    %193 = vmatpush1.bf16.msra.mxu0 %v165
    %194 = vmatprep.subr.bf16.mxu0 0
    %195 = vmatpush1.bf16.msra.mxu0 %v164
    %196 = vmatprep.subr.bf16.mxu0 0
    %197 = vmatpush2.bf16.msra.mxu0 0
    %198 = vmatprep.subr.bf16.mxu0 0
    %199 = vmatpush2.bf16.msra.mxu0 0
    %200 = vmatprep.subr.bf16.mxu0 0
    %201 = vmatpush2.bf16.msra.mxu0 0
    %202 = vmatprep.subr.bf16.mxu0 0
    %203 = vmatpush2.bf16.msra.mxu0 0
    %204 = vmatprep.subr.bf16.mxu0 0
    %205 = vmatpush2.bf16.msra.mxu0 0
    %206 = vmatprep.subr.bf16.mxu0 0
    %207 = vmatpush2.bf16.msra.mxu0 0
    %208 = vmatprep.subr.bf16.mxu0 0
    %209 = vmatpush2.bf16.msra.mxu0 0
    %210 = vmatprep.subr.bf16.mxu0 0
    %211 = vmatpush2.bf16.msra.mxu0 0
    %212 = vmatprep.mubr.bf16.mxu0 0
    %213 = vmatmul.mubr.bf16.gmra.mxu0 %v108
    %v214 = vpop.f32.mrf.mxu0
    %v215 = vadd.f32 %v130, %v214
    %v216 = vpop.f32.mrf.mxu0
    %v217 = vpop.f32.mrf.mxu0
    %v218 = vpop.f32.mrf.mxu0
    %219 = vdwg.mxu0
    %220 = vst [vmem:[#allocation2] sm:$0xff] %v215
    // Predicated region
    $region22: #{simple_nn_forward.1} parent=1 // pred_check
      _
    $region23: #{simple_nn_forward.1} parent=1 // pred_check_branch
      %222 = sbr.rel (0) target = $region25
    $region24: #{simple_nn_forward.1} parent=1 // pred_region
      %s224 = ssub.s32 128, 128
      %225 = vsyncadd [#allocation3], %s224
      %s227 = sshll.u32 [#allocation2], 4
      %s228 = int_to_ptr.vmem [resolvable:$true] %s227
      %230 = dma.vmem_to_hbm [thread:$0]  %s228, 128, %s5, [#allocation3]
    $region25: #{simple_nn_forward.1} parent=1 // pred_fallthru
      _
    // Predicated region
    $region26: #{simple_nn_forward.1} parent=1 // pred_check
      _
    $region27: #{simple_nn_forward.1} parent=1 // pred_check_branch
      %232 = sbr.rel (0) target = $region29
    $region28: #{simple_nn_forward.1} parent=1 // pred_region
      %233 = dma.done [#allocation3], 128
    $region29: #{simple_nn_forward.1} parent=1 // pred_fallthru
      _
    %234 = vsyncpa [#allocation3], 1

</llo_original>
